<compile_context>
chip_gen: v5e
topology: v5e:2x2
jax: 0.10.0
libtpu: 0.0.40
codegen_flags: <defaults>
</compile_context>

<pallas_src>
import numpy as np
import jax
import jax.numpy as jnp
from jax import lax
from jax.experimental import pallas as pl
from jax.experimental.pallas import tpu as pltpu


# ---------------------------------------------------------------------------
# Parameter / weight-matrix setup (plain numpy glue)
# ---------------------------------------------------------------------------
def get_target_size(height, width, min_size, max_size):
    """Mirror of BatchResize.get_target_size."""
    im_size_min = min(height, width)
    im_size_max = max(height, width)
    scale = min_size / im_size_min
    if scale * im_size_max > max_size:
        scale = max_size / im_size_max
    return int(round(height * scale)), int(round(width * scale)), scale


def bilinear_weight_matrix(in_size, out_size, padded_out_size):
    """Interpolation matrix matching F.interpolate(mode='bilinear',
    align_corners=False) along one axis.  Rows >= out_size are zero."""
    scale = in_size / out_size
    o = np.arange(out_size, dtype=np.float64)
    src = np.maximum((o + 0.5) * scale - 0.5, 0.0)   # PyTorch clamps negatives
    i0 = np.minimum(np.floor(src).astype(np.int64), in_size - 1)
    lam = (src - i0).astype(np.float32)
    i1 = np.minimum(i0 + 1, in_size - 1)
    Wm = np.zeros((padded_out_size, in_size), dtype=np.float32)
    rows = np.arange(out_size)
    np.add.at(Wm, (rows, i0), 1.0 - lam)
    np.add.at(Wm, (rows, i1), lam)
    return Wm


# ---------------------------------------------------------------------------
# Hardware-aware planning helpers
# ---------------------------------------------------------------------------
def _vmem_capacity_bytes():
    try:
        info = pltpu.get_tpu_info()
        cap = int(getattr(info, "vmem_capacity_bytes", 0))
        if cap > 0:
            return cap
    except Exception:
        pass
    return 64 << 20                     # conservative default (v7x per-TC)


def _pick_group_size(n_planes, per_plane_bytes, budget, min_groups, max_kc=16):
    """Largest divisor kc of n_planes (<= max_kc) keeping >= min_groups grid
    groups and fitting the per-group fixed VMEM cost under `budget`."""
    min_groups = min(min_groups, max(1, n_planes))
    best = 1
    for kc in range(1, min(max_kc, n_planes) + 1):
        if n_planes % kc:
            continue
        if n_planes // kc < min_groups:
            continue
        if kc * per_plane_bytes > budget:
            continue
        best = kc
    return best


def _pick_hp_tile(hp, cap_rows):
    """Output-row tile: prefer a divisor of hp that is a multiple of the MXU
    M-granule (256, then 128), then a multiple of 8, then hp itself, and only
    as a last resort a non-dividing multiple-of-8 tile (ragged last block,
    which is safe because the row-weight matrix is padded)."""
    cap = max(8, min(int(cap_rows), hp))
    best = {256: 0, 128: 0, 8: 0}
    for d in range(1, min(cap, hp) + 1):
        if hp % d:
            continue
        for g in (256, 128, 8):
            if d % g == 0:
                best[g] = d
    for g in (256, 128, 8):
        if best[g]:
            return best[g]
    if hp <= cap:
        return hp                       # full extent (allowed even if not %8)
    return max(8, cap // 8 * 8)         # ragged last tile; OOB writes dropped


# ---------------------------------------------------------------------------
# Kernel factory
# ---------------------------------------------------------------------------
def _make_kernel(kc, tile_hp, wp, th, tw, pad_value, w_first, stash):
    need_mask = float(pad_value) != 0.0
    pad_f32 = float(pad_value)

    def body(x_ref, wh_ref, wwt_ref, o_ref, scr_ref):
        t = pl.program_id(1)

        # ---- per-group work, hoisted out of the row-tile loop --------------
        if stash:
            @pl.when(t == 0)
            def _():
                if w_first:
                    wwt0 = wwt_ref[...]                       # (W, wp) bf16
                    for k in range(kc):
                        t1 = jnp.dot(x_ref[k].astype(jnp.bfloat16), wwt0,
                                     preferred_element_type=jnp.float32)
                        scr_ref[k] = t1.astype(jnp.bfloat16)  # (H, wp)
                else:
                    scr_ref[...] = x_ref[...].astype(jnp.bfloat16)

        wh = wh_ref[...]                                      # (tile_hp, H) bf16
        if (not w_first) or (not stash):
            wwt = wwt_ref[...]                                # (W, wp) bf16
        else:
            wwt = None

        if need_mask:
            rows = lax.broadcasted_iota(jnp.int32, (tile_hp, wp), 0) + t * tile_hp
            cols = lax.broadcasted_iota(jnp.int32, (tile_hp, wp), 1)
            valid = jnp.logical_and(rows < th, cols < tw)

        # ---- per-plane matmuls ----------------------------------------------
        for k in range(kc):
            if w_first:
                if stash:
                    t1 = scr_ref[k]                           # (H, wp) bf16
                else:
                    t1 = jnp.dot(x_ref[k].astype(jnp.bfloat16), wwt,
                                 preferred_element_type=jnp.float32
                                 ).astype(jnp.bfloat16)
                out = jnp.dot(wh, t1, preferred_element_type=jnp.float32)
            else:
                xk = scr_ref[k] if stash else x_ref[k].astype(jnp.bfloat16)
                t1 = jnp.dot(wh, xk, preferred_element_type=jnp.float32)
                out = jnp.dot(t1.astype(jnp.bfloat16), wwt,
                              preferred_element_type=jnp.float32)
            if need_mask:
                out = jnp.where(valid, out, jnp.float32(pad_f32))
            o_ref[k] = out.astype(o_ref.dtype)

    if stash:
        def kernel(x_ref, wh_ref, wwt_ref, o_ref, scr_ref):
            body(x_ref, wh_ref, wwt_ref, o_ref, scr_ref)
    else:
        def kernel(x_ref, wh_ref, wwt_ref, o_ref):
            body(x_ref, wh_ref, wwt_ref, o_ref, None)
    return kernel


# ---------------------------------------------------------------------------
# Wrapper
# ---------------------------------------------------------------------------
def batch_resize(inputs, scale, pad_size_divisor=1, pad_value=0.0,
                 *, _max_tile_rows=None, _force_order=None):
    """JAX/Pallas equivalent of BatchResize.forward for the image tensor.

    inputs: (B, C, H, W) float array (NCHW).
    Returns: ((B, C, H_pad, W_pad) array, python scale factor).
    """
    B, C, H, W = inputs.shape
    n_planes = B * C
    min_size, max_size = min(scale), max(scale)
    th, tw, sf = get_target_size(H, W, min_size, max_size)
    divisor = int(pad_size_divisor)
    hp = -(-th // divisor) * divisor
    wp = -(-tw // divisor) * divisor

    in_sz = np.dtype(inputs.dtype).itemsize
    out_sz = in_sz
    bf = 2                                              # bf16 bytes

    # ---- generation-aware VMEM planning --------------------------------------
    vmem_cap = _vmem_capacity_bytes()
    plan_budget = max(min(int(vmem_cap * 0.75), vmem_cap - (16 << 20)), 24 << 20)
    # 64 MiB VMEM => v7x-like (2 TensorCores): keep >= 2 grid groups for
    # megacore sharding.  128 MiB single-TC chips gain nothing from it.
    min_groups = 2 if vmem_cap <= (64 << 20) else 1

    # ---- contraction order (static choice by MAC count) ----------------------
    macs_w_first = H * wp * (W + hp)       # (x @ WwT) once, then Wh_tile @ t1
    macs_h_first = hp * W * (H + wp)       # Wh_tile @ x, then (.) @ WwT
    if _force_order == "w":
        w_first = True
    elif _force_order == "h":
        w_first = False
    else:
        w_first = macs_w_first < macs_h_first
    macs = macs_w_first if w_first else macs_h_first

    # ---- plane grouping (kc) ---------------------------------------------------
    scratch_per_plane = H * wp * bf if w_first else H * W * bf
    per_plane = 2 * H * W * in_sz + scratch_per_plane   # x (dbl-buf) + stash
    kc = _pick_group_size(n_planes, per_plane, plan_budget // 2, min_groups)
    num_groups = n_planes // kc

    # ---- output-row tiling ------------------------------------------------------
    fixed = (2 * kc * H * W * in_sz              # input block (double-buffered)
             + 2 * W * wp * bf                   # WwT (resident)
             + kc * scratch_per_plane            # per-group VMEM stash
             + (H * wp * 4 if w_first else 0))   # f32 temp while filling stash
    per_row = (2 * kc * wp * out_sz              # output block (double-buffered)
               + 2 * H * bf                      # Wh row-tile
               + (W * 6 if not w_first else 0)   # per-plane (tile_hp, W) temps
               + wp * 8)                         # f32 result + mask temps
    cap_rows = (plan_budget - fixed) // per_row if plan_budget > fixed else 8
    if _max_tile_rows is not None:
        cap_rows = min(cap_rows, int(_max_tile_rows))
    tile_hp = _pick_hp_tile(hp, cap_rows)
    num_hp_tiles = -(-hp // tile_hp)
    hp_padded = num_hp_tiles * tile_hp           # Wh is padded -> ragged-safe
    stash = num_hp_tiles > 1

    # ---- weights in bf16 (MXU-native, half the resident VMEM) ------------------
    wh = jnp.asarray(bilinear_weight_matrix(H, th, hp_padded), jnp.bfloat16)   # (hp_padded, H)
    wwt = jnp.asarray(bilinear_weight_matrix(W, tw, wp).T, jnp.bfloat16)       # (W, wp)

    in_specs = [
        pl.BlockSpec((kc, H, W), lambda g, t: (g, 0, 0)),   # reused across row tiles
        pl.BlockSpec((tile_hp, H), lambda g, t: (t, 0)),
        pl.BlockSpec((W, wp), lambda g, t: (0, 0)),          # resident
    ]
    out_spec = pl.BlockSpec((kc, tile_hp, wp), lambda g, t: (g, t, 0))
    scratch_shapes = []
    if stash:
        shp = (kc, H, wp) if w_first else (kc, H, W)
        scratch_shapes.append(pltpu.VMEM(shp, jnp.bfloat16))

    vmem_est = (2 * kc * H * W * in_sz + 2 * tile_hp * H * bf + 2 * W * wp * bf
                + 2 * kc * tile_hp * wp * out_sz
                + (kc * scratch_per_plane if stash else 0)
                + tile_hp * wp * 8
                + (H * wp * 4 if w_first else tile_hp * W * 6))
    vmem_limit = int(min(vmem_cap - (8 << 20), max(32 << 20, vmem_est * 3 // 2)))
    vmem_limit = max(vmem_limit, vmem_est + (2 << 20))
    vmem_limit = int(min(vmem_limit, vmem_cap - (4 << 20)))

    flops = int(2 * n_planes * macs)
    bytes_accessed = int(n_planes * (H * W * in_sz + hp * wp * out_sz)
                         + hp_padded * H * bf + W * wp * bf)

    kernel = _make_kernel(kc, tile_hp, wp, th, tw, pad_value, w_first, stash)
    out_flat = pl.pallas_call(
        kernel,
        out_shape=jax.ShapeDtypeStruct((n_planes, hp, wp), inputs.dtype),
        grid_spec=pltpu.PrefetchScalarGridSpec(
            num_scalar_prefetch=0,
            grid=(num_groups, num_hp_tiles),     # row-tile axis innermost
            in_specs=in_specs,
            out_specs=out_spec,
            scratch_shapes=tuple(scratch_shapes)),
        compiler_params=pltpu.CompilerParams(
            dimension_semantics=("parallel", "arbitrary"),
            vmem_limit_bytes=vmem_limit),
        cost_estimate=pl.CostEstimate(flops=flops, transcendentals=0,
                                      bytes_accessed=bytes_accessed),
    )(inputs.reshape(n_planes, H, W), wh, wwt)

    return out_flat.reshape(B, C, hp, wp), sf


# ---------------------------------------------------------------------------
# Pure-JAX fp32 reference (same weight construction)
# ---------------------------------------------------------------------------
def batch_resize_ref(inputs, scale, pad_size_divisor=1, pad_value=0.0):
    B, C, H, W = inputs.shape
    min_size, max_size = min(scale), max(scale)
    th, tw, _ = get_target_size(H, W, min_size, max_size)
    divisor = int(pad_size_divisor)
    hp = -(-th // divisor) * divisor
    wp = -(-tw // divisor) * divisor
    wh = jnp.asarray(bilinear_weight_matrix(H, th, hp))
    ww = jnp.asarray(bilinear_weight_matrix(W, tw, wp))
    out = jnp.einsum('ph,bchw,qw->bcpq', wh, inputs.astype(jnp.float32), ww)
    rows = jnp.arange(hp)[:, None]
    cols = jnp.arange(wp)[None, :]
    valid = (rows < th) & (cols < tw)
    return jnp.where(valid[None, None], out, jnp.float32(pad_value))


if __name__ == "__main__":
    key = jax.random.PRNGKey(0)
    B, C, H, W = 2, 4, 16, 16
    x = jax.random.uniform(key, (B, C, H, W), dtype=jnp.float32) * 255.0

    def check(out, ref, th, tw, pad_value):
        assert out.shape == ref.shape, (out.shape, ref.shape)
        o32 = out.astype(jnp.float32)
        max_err = float(jnp.max(jnp.abs(o32 - ref)))
        # bf16 MXU path with f32 accumulation vs fp32 reference.
        assert bool(jnp.allclose(o32, ref, atol=2.0, rtol=2e-2)), max_err
        hp_, wp_ = out.shape[-2:]
        if hp_ > th:
            assert bool(jnp.all(out[..., th:, :] == pad_value))
        if wp_ > tw:
            assert bool(jnp.all(out[..., :, tw:] == pad_value))

    # 1) default (H-first) order, single row tile, nonzero pad value.
    out1, sf1 = batch_resize(x, (24, 32), pad_size_divisor=32, pad_value=0.5)
    out1 = jax.block_until_ready(out1)
    assert out1.shape == (B, C, 32, 32), out1.shape
    assert abs(sf1 - 1.5) < 1e-6, sf1
    check(out1, batch_resize_ref(x, (24, 32), 32, 0.5), 24, 24, 0.5)

    # 2) W-first order, output width not a multiple of 128, pad_value == 0
    #    (padding comes solely from the zero weight rows/cols -> exact zeros).
    out2, sf2 = batch_resize(x, (20, 40), pad_size_divisor=8, pad_value=0.0,
                             _force_order="w")
    out2 = jax.block_until_ready(out2)
    assert out2.shape == (B, C, 24, 24), out2.shape
    assert abs(sf2 - 1.25) < 1e-6, sf2
    check(out2, batch_resize_ref(x, (20, 40), 8, 0.0), 20, 20, 0.0)

    # 3) multi-row-tile path (per-group VMEM stash + pl.when), H-first.
    out3, _ = batch_resize(x, (28, 64), pad_size_divisor=8, pad_value=1.0,
                           _max_tile_rows=16)
    out3 = jax.block_until_ready(out3)
    assert out3.shape == (B, C, 32, 32), out3.shape
    check(out3, batch_resize_ref(x, (28, 64), 8, 1.0), 28, 28, 1.0)

    # 4) multi-row-tile path, W-first (stashes the W-contraction).
    out4, _ = batch_resize(x, (28, 64), pad_size_divisor=8, pad_value=1.0,
                           _max_tile_rows=16, _force_order="w")
    out4 = jax.block_until_ready(out4)
    check(out4, batch_resize_ref(x, (28, 64), 8, 1.0), 28, 28, 1.0)

    print("KERNEL_OK")
</pallas_src>

<mosaic_0001>
module attributes {stable_mosaic.version = 11 : i64} {
  func.func @kernel(%arg0: i32, %arg1: i32, %arg2: memref<4x16x16xf32, #tpu.memory_space<vmem>>, %arg3: memref<32x16xbf16, #tpu.memory_space<vmem>>, %arg4: memref<16x32xbf16, #tpu.memory_space<vmem>>, %arg5: memref<4x32x32xf32, #tpu.memory_space<vmem>>) attributes {dimension_semantics = [#tpu.dimension_semantics<parallel>, #tpu.dimension_semantics<arbitrary>], iteration_bounds = array<i64: 2, 1>, scalar_prefetch = 0 : i64, scratch_operands = 0 : i64, tpu.core_type = #tpu.core_type<tc>, window_params = [{transform_indices = @transform_0, window_bounds = array<i64: 4, 16, 16>}, {transform_indices = @transform_1, window_bounds = array<i64: 32, 16>}, {pipeline_mode = #tpu.pipeline_mode<synchronous>, transform_indices = @transform_2, window_bounds = array<i64: 16, 32>}, {transform_indices = @transform_3, window_bounds = array<i64: 4, 32, 32>}]} {
    %c0 = arith.constant 0 : index
    %c0_0 = arith.constant 0 : index
    %0 = vector.load %arg3[%c0, %c0_0] : memref<32x16xbf16, #tpu.memory_space<vmem>>, vector<32x16xbf16>
    %c0_1 = arith.constant 0 : index
    %c0_2 = arith.constant 0 : index
    %1 = vector.load %arg4[%c0_1, %c0_2] : memref<16x32xbf16, #tpu.memory_space<vmem>>, vector<16x32xbf16>
    %2 = tpu.iota {dimensions = array<i32: 0>} : vector<32x32xi32>
    %c32_i32 = arith.constant 32 : i32
    %3 = arith.muli %arg1, %c32_i32 : i32
    %4 = vector.broadcast %3 : i32 to vector<32x32xi32>
    %5 = arith.addi %2, %4 : vector<32x32xi32>
    %6 = tpu.iota {dimensions = array<i32: 1>} : vector<32x32xi32>
    %c24_i32 = arith.constant 24 : i32
    %7 = vector.broadcast %c24_i32 : i32 to vector<32x32xi32>
    %8 = arith.cmpi slt, %5, %7 : vector<32x32xi32>
    %c24_i32_3 = arith.constant 24 : i32
    %9 = vector.broadcast %c24_i32_3 : i32 to vector<32x32xi32>
    %10 = arith.cmpi slt, %6, %9 : vector<32x32xi32>
    %11 = arith.andi %8, %10 : vector<32x32xi1>
    %c0_4 = arith.constant 0 : index
    %c0_5 = arith.constant 0 : index
    %c0_6 = arith.constant 0 : index
    %12 = vector.load %arg2[%c0_4, %c0_5, %c0_6] : memref<4x16x16xf32, #tpu.memory_space<vmem>>, vector<1x16x16xf32>
    %13 = vector.shape_cast %12 : vector<1x16x16xf32> to vector<16x16xf32>
    %14 = arith.truncf %13 : vector<16x16xf32> to vector<16x16xbf16>
    %cst = arith.constant dense<0.000000e+00> : vector<32x16xf32>
    %15 = tpu.matmul %0, %14, %cst {dimension_numbers = #tpu.dot_dimension_numbers<[1], [0], [0], [1], [0, 0, 1, 1], [], []>} : vector<32x16xbf16>, vector<16x16xbf16>, vector<32x16xf32> -> vector<32x16xf32>
    %16 = arith.truncf %15 : vector<32x16xf32> to vector<32x16xbf16>
    %cst_7 = arith.constant dense<0.000000e+00> : vector<32x32xf32>
    %17 = tpu.matmul %16, %1, %cst_7 {dimension_numbers = #tpu.dot_dimension_numbers<[1], [0], [0], [1], [0, 0, 1, 1], [], []>} : vector<32x16xbf16>, vector<16x32xbf16>, vector<32x32xf32> -> vector<32x32xf32>
    %cst_8 = arith.constant 5.000000e-01 : f32
    %18 = vector.broadcast %cst_8 : f32 to vector<32x32xf32>
    %19 = arith.select %11, %17, %18 : vector<32x32xi1>, vector<32x32xf32>
    %c0_9 = arith.constant 0 : index
    %c0_10 = arith.constant 0 : index
    %c0_11 = arith.constant 0 : index
    %20 = vector.load %arg5[%c0_9, %c0_10, %c0_11] : memref<4x32x32xf32, #tpu.memory_space<vmem>>, vector<1x32x32xf32>
    %21 = vector.shape_cast %20 : vector<1x32x32xf32> to vector<32x32xf32>
    %22 = vector.shape_cast %19 : vector<32x32xf32> to vector<1x32x32xf32>
    tpu.vector_store %arg5[%c0_9, %c0_10, %c0_11], %22 {strides = array<i32>} : memref<4x32x32xf32, #tpu.memory_space<vmem>>, vector<1x32x32xf32>,
    %c1 = arith.constant 1 : index
    %c0_12 = arith.constant 0 : index
    %c0_13 = arith.constant 0 : index
    %23 = vector.load %arg2[%c1, %c0_12, %c0_13] : memref<4x16x16xf32, #tpu.memory_space<vmem>>, vector<1x16x16xf32>
    %24 = vector.shape_cast %23 : vector<1x16x16xf32> to vector<16x16xf32>
    %25 = arith.truncf %24 : vector<16x16xf32> to vector<16x16xbf16>
    %cst_14 = arith.constant dense<0.000000e+00> : vector<32x16xf32>
    %26 = tpu.matmul %0, %25, %cst_14 {dimension_numbers = #tpu.dot_dimension_numbers<[1], [0], [0], [1], [0, 0, 1, 1], [], []>} : vector<32x16xbf16>, vector<16x16xbf16>, vector<32x16xf32> -> vector<32x16xf32>
    %27 = arith.truncf %26 : vector<32x16xf32> to vector<32x16xbf16>
    %cst_15 = arith.constant dense<0.000000e+00> : vector<32x32xf32>
    %28 = tpu.matmul %27, %1, %cst_15 {dimension_numbers = #tpu.dot_dimension_numbers<[1], [0], [0], [1], [0, 0, 1, 1], [], []>} : vector<32x16xbf16>, vector<16x32xbf16>, vector<32x32xf32> -> vector<32x32xf32>
    %cst_16 = arith.constant 5.000000e-01 : f32
    %29 = vector.broadcast %cst_16 : f32 to vector<32x32xf32>
    %30 = arith.select %11, %28, %29 : vector<32x32xi1>, vector<32x32xf32>
    %c1_17 = arith.constant 1 : index
    %c0_18 = arith.constant 0 : index
    %c0_19 = arith.constant 0 : index
    %31 = vector.load %arg5[%c1_17, %c0_18, %c0_19] : memref<4x32x32xf32, #tpu.memory_space<vmem>>, vector<1x32x32xf32>
    %32 = vector.shape_cast %31 : vector<1x32x32xf32> to vector<32x32xf32>
    %33 = vector.shape_cast %30 : vector<32x32xf32> to vector<1x32x32xf32>
    tpu.vector_store %arg5[%c1_17, %c0_18, %c0_19], %33 {strides = array<i32>} : memref<4x32x32xf32, #tpu.memory_space<vmem>>, vector<1x32x32xf32>,
    %c2 = arith.constant 2 : index
    %c0_20 = arith.constant 0 : index
    %c0_21 = arith.constant 0 : index
    %34 = vector.load %arg2[%c2, %c0_20, %c0_21] : memref<4x16x16xf32, #tpu.memory_space<vmem>>, vector<1x16x16xf32>
    %35 = vector.shape_cast %34 : vector<1x16x16xf32> to vector<16x16xf32>
    %36 = arith.truncf %35 : vector<16x16xf32> to vector<16x16xbf16>
    %cst_22 = arith.constant dense<0.000000e+00> : vector<32x16xf32>
    %37 = tpu.matmul %0, %36, %cst_22 {dimension_numbers = #tpu.dot_dimension_numbers<[1], [0], [0], [1], [0, 0, 1, 1], [], []>} : vector<32x16xbf16>, vector<16x16xbf16>, vector<32x16xf32> -> vector<32x16xf32>
    %38 = arith.truncf %37 : vector<32x16xf32> to vector<32x16xbf16>
    %cst_23 = arith.constant dense<0.000000e+00> : vector<32x32xf32>
    %39 = tpu.matmul %38, %1, %cst_23 {dimension_numbers = #tpu.dot_dimension_numbers<[1], [0], [0], [1], [0, 0, 1, 1], [], []>} : vector<32x16xbf16>, vector<16x32xbf16>, vector<32x32xf32> -> vector<32x32xf32>
    %cst_24 = arith.constant 5.000000e-01 : f32
    %40 = vector.broadcast %cst_24 : f32 to vector<32x32xf32>
    %41 = arith.select %11, %39, %40 : vector<32x32xi1>, vector<32x32xf32>
    %c2_25 = arith.constant 2 : index
    %c0_26 = arith.constant 0 : index
    %c0_27 = arith.constant 0 : index
    %42 = vector.load %arg5[%c2_25, %c0_26, %c0_27] : memref<4x32x32xf32, #tpu.memory_space<vmem>>, vector<1x32x32xf32>
    %43 = vector.shape_cast %42 : vector<1x32x32xf32> to vector<32x32xf32>
    %44 = vector.shape_cast %41 : vector<32x32xf32> to vector<1x32x32xf32>
    tpu.vector_store %arg5[%c2_25, %c0_26, %c0_27], %44 {strides = array<i32>} : memref<4x32x32xf32, #tpu.memory_space<vmem>>, vector<1x32x32xf32>,
    %c3 = arith.constant 3 : index
    %c0_28 = arith.constant 0 : index
    %c0_29 = arith.constant 0 : index
    %45 = vector.load %arg2[%c3, %c0_28, %c0_29] : memref<4x16x16xf32, #tpu.memory_space<vmem>>, vector<1x16x16xf32>
    %46 = vector.shape_cast %45 : vector<1x16x16xf32> to vector<16x16xf32>
    %47 = arith.truncf %46 : vector<16x16xf32> to vector<16x16xbf16>
    %cst_30 = arith.constant dense<0.000000e+00> : vector<32x16xf32>
    %48 = tpu.matmul %0, %47, %cst_30 {dimension_numbers = #tpu.dot_dimension_numbers<[1], [0], [0], [1], [0, 0, 1, 1], [], []>} : vector<32x16xbf16>, vector<16x16xbf16>, vector<32x16xf32> -> vector<32x16xf32>
    %49 = arith.truncf %48 : vector<32x16xf32> to vector<32x16xbf16>
    %cst_31 = arith.constant dense<0.000000e+00> : vector<32x32xf32>
    %50 = tpu.matmul %49, %1, %cst_31 {dimension_numbers = #tpu.dot_dimension_numbers<[1], [0], [0], [1], [0, 0, 1, 1], [], []>} : vector<32x16xbf16>, vector<16x32xbf16>, vector<32x32xf32> -> vector<32x32xf32>
    %cst_32 = arith.constant 5.000000e-01 : f32
    %51 = vector.broadcast %cst_32 : f32 to vector<32x32xf32>
    %52 = arith.select %11, %50, %51 : vector<32x32xi1>, vector<32x32xf32>
    %c3_33 = arith.constant 3 : index
    %c0_34 = arith.constant 0 : index
    %c0_35 = arith.constant 0 : index
    %53 = vector.load %arg5[%c3_33, %c0_34, %c0_35] : memref<4x32x32xf32, #tpu.memory_space<vmem>>, vector<1x32x32xf32>
    %54 = vector.shape_cast %53 : vector<1x32x32xf32> to vector<32x32xf32>
    %55 = vector.shape_cast %52 : vector<32x32xf32> to vector<1x32x32xf32>
    tpu.vector_store %arg5[%c3_33, %c0_34, %c0_35], %55 {strides = array<i32>} : memref<4x32x32xf32, #tpu.memory_space<vmem>>, vector<1x32x32xf32>,
    return
  }
  func.func @transform_0(%arg0: i32, %arg1: i32) -> (i32, i32, i32) {
    %c0_i32 = arith.constant 0 : i32
    %c0_i32_0 = arith.constant 0 : i32
    %c0_i32_1 = arith.constant 0 : i32
    return %arg0, %c0_i32, %c0_i32_0 : i32, i32, i32
  }
  func.func @transform_1(%arg0: i32, %arg1: i32) -> (i32, i32) {
    %c0_i32 = arith.constant 0 : i32
    %c0_i32_0 = arith.constant 0 : i32
    return %arg1, %c0_i32 : i32, i32
  }
  func.func @transform_2(%arg0: i32, %arg1: i32) -> (i32, i32) {
    %c0_i32 = arith.constant 0 : i32
    %c0_i32_0 = arith.constant 0 : i32
    %c0_i32_1 = arith.constant 0 : i32
    return %c0_i32, %c0_i32_0 : i32, i32
  }
  func.func @transform_3(%arg0: i32, %arg1: i32) -> (i32, i32, i32) {
    %c0_i32 = arith.constant 0 : i32
    %c0_i32_0 = arith.constant 0 : i32
    return %arg0, %arg1, %c0_i32 : i32, i32, i32
  }
}

</mosaic_0001>

<llo_original>
// kernel: tpu_custom_call.1
$region0: #{tpu_custom_call.1}
  #allocation0 [shape = 'u32[]', space=smem, size = 0x4, offset = 0x4, fixed_abs, tag = 'smem constant byte address 0x4 - core index']
  #allocation1 [shape = 'u32[72,128]{1,0:T(1,128)}', space=vmem, size = 0x9000, scoped, tag = 'internal scratch']
  %s0 = inlined_call_operand.hbm [shape: f32[8,16,16], index: 0, kind: input, shape index: {}]
  %s1 = inlined_call_operand.vmem [shape: bf16[32,16], index: 1, kind: input, shape index: {}]
  %s2 = inlined_call_operand.vmem [shape: bf16[16,32], index: 2, kind: input, shape index: {}]
  %s3 = inlined_call_operand.hbm [shape: f32[8,32,32], index: 3, kind: output, shape index: {}]
  %s4 = sld [smem:[#allocation0]]
  $region49: #{tpu_custom_call.1} parent=0
    _
  %s6 = ssub.s32 1, %s4
  %s7 = scalar_select 0, %s6, %s4
  $region1: #{tpu_custom_call.1} parent=0
    #allocation2 [shape = 'u8[65536]{0}', space=vmem, size = 0x10000, scoped, tag = 'input window, operand 0']
    #allocation3 [shape = 's32[2]{0}', space=sflag, size = 0x8, scoped, tag = 'scoped memory for tpu_custom_call.1']
    #allocation4 [shape = 's32[2]{0}', space=sflag, size = 0x8, scoped, tag = 'scoped memory for tpu_custom_call.1']
    #allocation5 [shape = 'u8[131072]{0}', space=vmem, size = 0x20000, scoped, tag = 'output window, operand 0']
    %8 = vsyncpa [#allocation3], 0
    %s9 = scalar_lea.sflag [#allocation3], 1
    %10 = vsyncpa %s9, 0
    %11 = vsyncpa [#allocation4], 0
    %s12 = scalar_lea.sflag [#allocation4], 1
    %13 = vsyncpa %s12, 0
    loop: start=0, step=1, limit=4
    $region2: #{tpu_custom_call.1} parent=1 // loop_pre_header
      _
    $region3: #{tpu_custom_call.1} parent=1 // loop_header
      %s15 = sphi 0, %s19
      %p16 = scmp.ge.s32.totalorder %s15, 4
      %s22 = sphi 0, %s34
      %s23 = sphi 0, %s30
      %s24 = sphi 0, %s22
      %s25 = sphi 0, %s23
      %s26 = sphi 0, %s24
      %s27 = sphi 0, %s25
      %s37 = sphi 0, %s39
      %s40 = sphi 0, %s37
      %s41 = sphi 0, %s40
      %s57 = sphi 0, %s41
      %s63 = sphi 0, %s65
      %s66 = sphi 0, %s63
      %s67 = sphi 0, %s66
      %s83 = sphi 0, %s67
      %s87 = sphi 0, %s87
      %s89 = sphi 0, %s87
      %s90 = sphi 0, %s89
      %s104 = sphi 0, %s90
      %s112 = sphi 0, %s114
      %s115 = sphi 0, %s112
      %s116 = sphi 0, %s115
      %s132 = sphi 0, %s116
    $region4: #{tpu_custom_call.1} parent=1 // loop_header_branch
      %18 = sbr.rel (%p16) target = $region8
    $region5: #{tpu_custom_call.1} parent=1 // loop_body
      %s20 = ssub.s32 %s15, 1
      %s21 = ssub.s32 %s15, 2
      %s28 = sadd.s32 1, %s23
      %p29 = scmp.ge.s32.totalorder %s28, 1
      %s30 = scalar_select %p29, 0, %s28
      %s31 = sadd.s32 1, %s22
      %s32 = scalar_select %p29, %s31, %s22
      %p33 = scmp.ge.s32.totalorder %s32, 2
      %s34 = scalar_select %p33, 0, %s32
      %s35 = ssub.s32 %s22, %s34
      %p36 = scmp.eq.s32.totalorder %s35, 0
      %s38 = sadd.s32 %s37, 1
      %s39 = scalar_select %p36, %s37, %s38
      %p42 = pneg %p36
      %p43 = scmp.eq.s32.totalorder %s15, 1
      %p44 = por %p42, %p43
      %p45 = scmp.ne.s32.totalorder %s37, %s40
      %p46 = scmp.eq.s32.totalorder %s15, 0
      %p47 = por %p45, %p46
      %p48 = scmp.ne.s32.totalorder %s37, %s40
      %p49 = scmp.eq.s32.totalorder %s20, 1
      %p50 = por %p48, %p49
      %p51 = scmp.ne.s32.totalorder %s40, %s41
      %p52 = scmp.eq.s32.totalorder %s20, 0
      %p53 = por %p51, %p52
      %p54 = scmp.ne.s32.totalorder %s40, %s41
      %p55 = scmp.eq.s32.totalorder %s21, 1
      %p56 = por %p54, %p55
      %p58 = scmp.ne.s32.totalorder %s41, %s57
      %p59 = scmp.eq.s32.totalorder %s21, 0
      %p60 = por %p58, %p59
      %s61 = ssub.s32 %s23, %s30
      %p62 = scmp.eq.s32.totalorder %s61, 0
      %s64 = sadd.s32 %s63, 1
      %s65 = scalar_select %p62, %s63, %s64
      %p68 = pneg %p62
      %p69 = scmp.eq.s32.totalorder %s15, 1
      %p70 = por %p68, %p69
      %p71 = scmp.ne.s32.totalorder %s63, %s66
      %p72 = scmp.eq.s32.totalorder %s15, 0
      %p73 = por %p71, %p72
      %p74 = scmp.ne.s32.totalorder %s63, %s66
      %p75 = scmp.eq.s32.totalorder %s20, 1
      %p76 = por %p74, %p75
      %p77 = scmp.ne.s32.totalorder %s66, %s67
      %p78 = scmp.eq.s32.totalorder %s20, 0
      %p79 = por %p77, %p78
      %p80 = scmp.ne.s32.totalorder %s66, %s67
      %p81 = scmp.eq.s32.totalorder %s21, 1
      %p82 = por %p80, %p81
      %p84 = scmp.ne.s32.totalorder %s67, %s83
      %p85 = scmp.eq.s32.totalorder %s21, 0
      %p86 = por %p84, %p85
      %s88 = sadd.s32 %s87, 1
      %p91 = scmp.eq.s32.totalorder %s15, 1
      %p92 = scmp.ne.s32.totalorder %s87, %s89
      %p93 = scmp.eq.s32.totalorder %s15, 0
      %p94 = por %p92, %p93
      %p95 = scmp.ne.s32.totalorder %s87, %s89
      %p96 = scmp.eq.s32.totalorder %s20, 1
      %p97 = por %p95, %p96
      %p98 = scmp.ne.s32.totalorder %s89, %s90
      %p99 = scmp.eq.s32.totalorder %s20, 0
      %p100 = por %p98, %p99
      %p101 = scmp.ne.s32.totalorder %s89, %s90
      %p102 = scmp.eq.s32.totalorder %s21, 1
      %p103 = por %p101, %p102
      %p105 = scmp.ne.s32.totalorder %s90, %s104
      %p106 = scmp.eq.s32.totalorder %s21, 0
      %p107 = por %p105, %p106
      %s108 = ssub.s32 %s22, %s34
      %s109 = ssub.s32 %s23, %s30
      %s110 = sor.u32 %s108, %s109
      %p111 = scmp.eq.s32.totalorder %s110, 0
      %s113 = sadd.s32 %s112, 1
      %s114 = scalar_select %p111, %s112, %s113
      %p117 = pneg %p111
      %p118 = scmp.eq.s32.totalorder %s15, 1
      %p119 = por %p117, %p118
      %p120 = scmp.ne.s32.totalorder %s112, %s115
      %p121 = scmp.eq.s32.totalorder %s15, 0
      %p122 = por %p120, %p121
      %p123 = scmp.ne.s32.totalorder %s112, %s115
      %p124 = scmp.eq.s32.totalorder %s20, 1
      %p125 = por %p123, %p124
      %p126 = scmp.ne.s32.totalorder %s115, %s116
      %p127 = scmp.eq.s32.totalorder %s20, 0
      %p128 = por %p126, %p127
      %p129 = scmp.ne.s32.totalorder %s115, %s116
      %p130 = scmp.eq.s32.totalorder %s21, 1
      %p131 = por %p129, %p130
      %p133 = scmp.ne.s32.totalorder %s116, %s132
      %p134 = scmp.eq.s32.totalorder %s21, 0
      %p135 = por %p133, %p134
      %p136 = scmp.le.s32.totalorder 1, %s15
      %p137 = scmp.lt.s32.totalorder %s15, 3
      %p138 = pnand %p136, %p137
      %p139 = pneg %p138
      // Predicated region
      $region9: #{tpu_custom_call.1} parent=5 // pred_check
        _
      $region10: #{tpu_custom_call.1} parent=5 // pred_check_branch
        %141 = sbr.rel (%p138) target = $region12
      $region11: #{tpu_custom_call.1} parent=5 // pred_region
        %s142 = ssub.s32 %s15, 1
        // Predicated region
        $region13: #{tpu_custom_call.1} parent=11 // pred_check
          %p143 = pneg %p79
        $region14: #{tpu_custom_call.1} parent=11 // pred_check_branch
          %145 = sbr.rel (%p143) target = $region16
        $region15: #{tpu_custom_call.1} parent=11 // pred_region
          %s146 = smul.u32 4, %s25
          %p147 = scmp.lt.s32.totalorder %s146, 3
          %s148 = scalar_select %p147, %s146, 3
          %s149 = smul.addr %s148, 4
          %s150 = scalar_lea.vmem %s1, %s149
          %s151 = smul.u32 4, %s25
        $region16: #{tpu_custom_call.1} parent=11 // pred_fallthru
          _
        // Predicated region
        $region17: #{tpu_custom_call.1} parent=11 // pred_check
          %p152 = pneg %p100
        $region18: #{tpu_custom_call.1} parent=11 // pred_check_branch
          %154 = sbr.rel (%p152) target = $region20
        $region19: #{tpu_custom_call.1} parent=11 // pred_region
          _
        $region20: #{tpu_custom_call.1} parent=11 // pred_fallthru
          _
      $region12: #{tpu_custom_call.1} parent=5 // pred_fallthru
        _
      %p155 = scmp.lt.s32.totalorder %s15, 2
      // Predicated region
      $region21: #{tpu_custom_call.1} parent=5 // pred_check
        %p156 = pneg %p155
      $region22: #{tpu_custom_call.1} parent=5 // pred_check_branch
        %158 = sbr.rel (%p156) target = $region24
      $region23: #{tpu_custom_call.1} parent=5 // pred_region
        // Predicated region
        $region25: #{tpu_custom_call.1} parent=23 // pred_check
          %p159 = pneg %p47
        $region26: #{tpu_custom_call.1} parent=23 // pred_check_branch
          %161 = sbr.rel (%p159) target = $region28
        $region27: #{tpu_custom_call.1} parent=23 // pred_region
          %s162 = sand.u32 %s37, 1
          %s163 = scalar_lea.sflag [#allocation3], %s162
          %s164 = sand.u32 %s37, 1
          %s165 = smul.addr %s164, 64
          %s166 = scalar_lea.vmem [#allocation2], %s165
          %s167 = smul.u32 4, %s22
          %169 = vsyncadd %s163, 0
          %s170 = smul.addr %s167, 2
          %s171 = smul.addr %s170, 8
          %s172 = scalar_lea.hbm %s0, %s171
          %s173 = sshll.u32 %s172, 4
          %s174 = int_to_ptr.hbm [resolvable:$true] %s173
          %s175 = sshll.u32 %s166, 4
          %s176 = int_to_ptr.vmem [resolvable:$true] %s175
          %181 = dma.hbm_to_vmem [thread:$0]  %s174, 1024, %s176, %s163, 128, 128, 8
        $region28: #{tpu_custom_call.1} parent=23 // pred_fallthru
          _
      $region24: #{tpu_custom_call.1} parent=5 // pred_fallthru
        _
      %p182 = scmp.le.s32.totalorder 1, %s15
      %p183 = scmp.lt.s32.totalorder %s15, 3
      %p184 = pnand %p182, %p183
      %p185 = pneg %p184
      // Predicated region
      $region29: #{tpu_custom_call.1} parent=5 // pred_check
        _
      $region30: #{tpu_custom_call.1} parent=5 // pred_check_branch
        %187 = sbr.rel (%p184) target = $region32
      $region31: #{tpu_custom_call.1} parent=5 // pred_region
        %s188 = ssub.s32 %s15, 1
        %s189 = sand.u32 %s40, 1
        %s190 = scalar_lea.sflag [#allocation3], %s189
        %s191 = sand.u32 %s40, 1
        %s192 = smul.addr %s191, 64
        %s193 = scalar_lea.vmem [#allocation2], %s192
        // Predicated region
        $region33: #{tpu_custom_call.1} parent=31 // pred_check
          %p194 = pneg %p53
        $region34: #{tpu_custom_call.1} parent=31 // pred_check_branch
          %196 = sbr.rel (%p194) target = $region36
        $region35: #{tpu_custom_call.1} parent=31 // pred_region
          %198 = dma.done %s190, 1024
        $region36: #{tpu_custom_call.1} parent=31 // pred_fallthru
          _
        %s199 = sand.u32 %s40, 1
        %s200 = scalar_lea.sflag [#allocation3], %s199
        %s201 = sand.u32 %s40, 1
        %s202 = smul.addr %s201, 64
        %s203 = scalar_lea.vmem [#allocation2], %s202
        %p204 = pneg %p53
        %p205 = pneg %p50
        %s206 = smul.u32 4, %s25
        %p207 = scmp.lt.s32.totalorder %s206, 3
        %s208 = scalar_select %p207, %s206, 3
        %s209 = smul.addr %s208, 4
        %s210 = scalar_lea.vmem %s1, %s209
        %p211 = pneg %p79
        %p212 = pneg %p76
        %p213 = pneg %p100
        %p214 = pneg %p97
        %p215 = pneg %p128
        %p216 = pneg %p125
        %s217 = sand.u32 %s115, 1
        %s218 = scalar_lea.sflag [#allocation4], %s217
        %s219 = sand.u32 %s115, 1
        %s220 = smul.addr %s219, 128
        %s221 = scalar_lea.vmem [#allocation5], %s220
        %s222 = smul.u32 4, %s24
        %s223 = smul.u32 4, %s25
        %p224 = scmp.lt.s32.totalorder %s223, 3
        %s225 = scalar_select %p224, %s223, 3
        %s226 = smul.addr %s225, 4
        %s227 = scalar_lea.vmem %s1, %s226
        %s228 = smul.u32 4, %s25
        %s229 = smul.u32 4, %s24
        %s230 = smul.u32 4, %s25
        %v232 = vld [vmem:[%s227] sm:$0xf]
        %v233 = vld [vmem:[%s227 + $0x4] sm:$0xf]
        %v234 = vld [vmem:[%s227 + $0x8] sm:$0xf]
        %v235 = vld [vmem:[%s227 + $0xc] sm:$0xf]
        %v236 = vld [vmem:[%s2] sm:$0xf]
        %v237 = vld [vmem:[%s2 + $0x4] sm:$0xf]
        %v238 = vlaneseq
        %v239 = vshrl.u32 %v238, 7
        %v240 = vadd.s32 %v239, 8
        %v241 = vadd.s32 %v239, 16
        %v242 = vadd.s32 %v239, 24
        %s243 = smul.u32 %s25, 32
        %v244 = vstv %s243
        %v245 = vadd.s32 %v239, %v244
        %v246 = vadd.s32 %v240, %v244
        %v247 = vadd.s32 %v241, %v244
        %v248 = vadd.s32 %v242, %v244
        %v249 = vlaneseq
        %v250 = vand.u32 %v249, 127
        %vm251 = vcmp.lt.s32.totalorder %v245, 24
        %vm252 = vcmp.lt.s32.totalorder %v246, 24
        %vm253 = vcmp.lt.s32.totalorder %v247, 24
        %vm254 = vcmp.lt.s32.totalorder %v248, 24
        %vm255 = vcmp.lt.s32.totalorder %v250, 24
        %vm256 = vmand %vm251, %vm255
        %vm257 = vmand %vm252, %vm255
        %vm258 = vmand %vm253, %vm255
        %vm259 = vmand %vm254, %vm255
        %v260 = vld [vmem:[%s193] sm:$0xff]
        %v261 = vld [vmem:[%s193 + $0x8] sm:$0xff]
        %v262 = vpack.c.bf16 %v261, %v260
        %v267 = vunpack.c.l.b16 %v232
        %v268 = vunpack.c.l.b16 %v233
        %v269 = vunpack.c.l.b16 %v234
        %v270 = vunpack.c.l.b16 %v235
        %v271 = vpack.c.b16 %v268, %v267
        %v272 = vpack.c.b16 %v270, %v269
        %vm273 = vcmask 130048
        %v275 = vsel %vm273, %v271, 0
        %v278 = vsel %vm273, %v272, 0
        %280 = vmatpush.bf16.msra.mxu0 0
        %281 = vmatpush.bf16.msra.mxu0 0
        %282 = vmatpush.bf16.msra.mxu0 0
        %283 = vmatpush.bf16.msra.mxu0 0
        %284 = vmatpush.bf16.msra.mxu0 0
        %285 = vmatpush.bf16.msra.mxu0 0
        %286 = vmatpush.bf16.msra.mxu0 0
        %287 = vmatpush.bf16.msra.mxu0 %v262
        %288 = vmatmul.bf16.gmra.mxu0 %v275
        %v289 = vpop.f32.mrf.mxu0
        %v290 = vadd.f32 0.0, %v289
        %v291 = vpop.f32.mrf.mxu0
        %v292 = vadd.f32 0.0, %v291
        %293 = vmatmul.bf16.gmra.mxu0 %v278
        %v294 = vpop.f32.mrf.mxu0
        %v295 = vadd.f32 0.0, %v294
        %v296 = vpop.f32.mrf.mxu0
        %v297 = vadd.f32 0.0, %v296
        %298 = vdwg.mxu0
        %v299 = vpack.c.bf16 %v292, %v290
        %v300 = vpack.c.bf16 %v297, %v295
        %v303 = vunpack.c.l.b16 %v236
        %v304 = vunpack.c.l.b16 %v237
        %v305 = vpack.c.b16 %v304, %v303
        %v308 = vsel %vm273, %v299, 0
        %v311 = vsel %vm273, %v300, 0
        %313 = vmatpush.bf16.msra.mxu0 0
        %314 = vmatpush.bf16.msra.mxu0 0
        %315 = vmatpush.bf16.msra.mxu0 0
        %316 = vmatpush.bf16.msra.mxu0 0
        %317 = vmatpush.bf16.msra.mxu0 0
        %318 = vmatpush.bf16.msra.mxu0 0
        %319 = vmatpush.bf16.msra.mxu0 0
        %320 = vmatpush.bf16.msra.mxu0 %v305
        %321 = vmatmul.bf16.gmra.mxu0 %v308
        %v322 = vpop.f32.mrf.mxu0
        %v323 = vadd.f32 0.0, %v322
        %v324 = vpop.f32.mrf.mxu0
        %v325 = vadd.f32 0.0, %v324
        %326 = vmatmul.bf16.gmra.mxu0 %v311
        %v327 = vpop.f32.mrf.mxu0
        %v328 = vadd.f32 0.0, %v327
        %v329 = vpop.f32.mrf.mxu0
        %v330 = vadd.f32 0.0, %v329
        %331 = vdwg.mxu0
        %v332 = vsel %vm256, %v323, 0.5
        %v333 = vsel %vm257, %v325, 0.5
        %v334 = vsel %vm258, %v328, 0.5
        %v335 = vsel %vm259, %v330, 0.5
        %vm336 = vcmask 261120
        %337 = vst.msk [vmem:[%s221] sm:$0xff] %vm336, %v332
        %338 = vst.msk [vmem:[%s221 + $0x8] sm:$0xff] %vm336, %v333
        %339 = vst.msk [vmem:[%s221 + $0x10] sm:$0xff] %vm336, %v334
        %340 = vst.msk [vmem:[%s221 + $0x18] sm:$0xff] %vm336, %v335
        %s341 = scalar_lea.vmem %s193, 16 [#allocation2]
        %v342 = vld [vmem:[%s341] sm:$0xff]
        %v343 = vld [vmem:[%s341 + $0x8] sm:$0xff]
        %v344 = vpack.c.bf16 %v343, %v342
        %345 = vmatpush.bf16.msra.mxu0 0
        %346 = vmatpush.bf16.msra.mxu0 0
        %347 = vmatpush.bf16.msra.mxu0 0
        %348 = vmatpush.bf16.msra.mxu0 0
        %349 = vmatpush.bf16.msra.mxu0 0
        %350 = vmatpush.bf16.msra.mxu0 0
        %351 = vmatpush.bf16.msra.mxu0 0
        %352 = vmatpush.bf16.msra.mxu0 %v344
        %353 = vmatmul.bf16.gmra.mxu0 %v275
        %v354 = vpop.f32.mrf.mxu0
        %v355 = vadd.f32 0.0, %v354
        %v356 = vpop.f32.mrf.mxu0
        %v357 = vadd.f32 0.0, %v356
        %358 = vmatmul.bf16.gmra.mxu0 %v278
        %v359 = vpop.f32.mrf.mxu0
        %v360 = vadd.f32 0.0, %v359
        %v361 = vpop.f32.mrf.mxu0
        %v362 = vadd.f32 0.0, %v361
        %363 = vdwg.mxu0
        %v364 = vpack.c.bf16 %v357, %v355
        %v365 = vpack.c.bf16 %v362, %v360
        %v367 = vsel %vm273, %v364, 0
        %v370 = vsel %vm273, %v365, 0
        %372 = vmatpush.bf16.msra.mxu0 0
        %373 = vmatpush.bf16.msra.mxu0 0
        %374 = vmatpush.bf16.msra.mxu0 0
        %375 = vmatpush.bf16.msra.mxu0 0
        %376 = vmatpush.bf16.msra.mxu0 0
        %377 = vmatpush.bf16.msra.mxu0 0
        %378 = vmatpush.bf16.msra.mxu0 0
        %379 = vmatpush.bf16.msra.mxu0 %v305
        %380 = vmatmul.bf16.gmra.mxu0 %v367
        %v381 = vpop.f32.mrf.mxu0
        %v382 = vadd.f32 0.0, %v381
        %v383 = vpop.f32.mrf.mxu0
        %v384 = vadd.f32 0.0, %v383
        %385 = vmatmul.bf16.gmra.mxu0 %v370
        %v386 = vpop.f32.mrf.mxu0
        %v387 = vadd.f32 0.0, %v386
        %v388 = vpop.f32.mrf.mxu0
        %v389 = vadd.f32 0.0, %v388
        %390 = vdwg.mxu0
        %v391 = vsel %vm256, %v382, 0.5
        %v392 = vsel %vm257, %v384, 0.5
        %v393 = vsel %vm258, %v387, 0.5
        %v394 = vsel %vm259, %v389, 0.5
        %s395 = scalar_lea.vmem %s221, 32 [#allocation5]
        %396 = vst.msk [vmem:[%s395] sm:$0xff] %vm336, %v391
        %397 = vst.msk [vmem:[%s395 + $0x8] sm:$0xff] %vm336, %v392
        %398 = vst.msk [vmem:[%s395 + $0x10] sm:$0xff] %vm336, %v393
        %399 = vst.msk [vmem:[%s395 + $0x18] sm:$0xff] %vm336, %v394
        %s400 = scalar_lea.vmem %s193, 32 [#allocation2]
        %v401 = vld [vmem:[%s400] sm:$0xff]
        %v402 = vld [vmem:[%s400 + $0x8] sm:$0xff]
        %v403 = vpack.c.bf16 %v402, %v401
        %404 = vmatpush.bf16.msra.mxu0 0
        %405 = vmatpush.bf16.msra.mxu0 0
        %406 = vmatpush.bf16.msra.mxu0 0
        %407 = vmatpush.bf16.msra.mxu0 0
        %408 = vmatpush.bf16.msra.mxu0 0
        %409 = vmatpush.bf16.msra.mxu0 0
        %410 = vmatpush.bf16.msra.mxu0 0
        %411 = vmatpush.bf16.msra.mxu0 %v403
        %412 = vmatmul.bf16.gmra.mxu0 %v275
        %v413 = vpop.f32.mrf.mxu0
        %v414 = vadd.f32 0.0, %v413
        %v415 = vpop.f32.mrf.mxu0
        %v416 = vadd.f32 0.0, %v415
        %417 = vmatmul.bf16.gmra.mxu0 %v278
        %v418 = vpop.f32.mrf.mxu0
        %v419 = vadd.f32 0.0, %v418
        %v420 = vpop.f32.mrf.mxu0
        %v421 = vadd.f32 0.0, %v420
        %422 = vdwg.mxu0
        %v423 = vpack.c.bf16 %v416, %v414
        %v424 = vpack.c.bf16 %v421, %v419
        %v426 = vsel %vm273, %v423, 0
        %v429 = vsel %vm273, %v424, 0
        %431 = vmatpush.bf16.msra.mxu0 0
        %432 = vmatpush.bf16.msra.mxu0 0
        %433 = vmatpush.bf16.msra.mxu0 0
        %434 = vmatpush.bf16.msra.mxu0 0
        %435 = vmatpush.bf16.msra.mxu0 0
        %436 = vmatpush.bf16.msra.mxu0 0
        %437 = vmatpush.bf16.msra.mxu0 0
        %438 = vmatpush.bf16.msra.mxu0 %v305
        %439 = vmatmul.bf16.gmra.mxu0 %v426
        %v440 = vpop.f32.mrf.mxu0
        %v441 = vadd.f32 0.0, %v440
        %v442 = vpop.f32.mrf.mxu0
        %v443 = vadd.f32 0.0, %v442
        %444 = vmatmul.bf16.gmra.mxu0 %v429
        %v445 = vpop.f32.mrf.mxu0
        %v446 = vadd.f32 0.0, %v445
        %v447 = vpop.f32.mrf.mxu0
        %v448 = vadd.f32 0.0, %v447
        %449 = vdwg.mxu0
        %v450 = vsel %vm256, %v441, 0.5
        %v451 = vsel %vm257, %v443, 0.5
        %v452 = vsel %vm258, %v446, 0.5
        %v453 = vsel %vm259, %v448, 0.5
        %s454 = scalar_lea.vmem %s221, 64 [#allocation5]
        %455 = vst.msk [vmem:[%s454] sm:$0xff] %vm336, %v450
        %456 = vst.msk [vmem:[%s454 + $0x8] sm:$0xff] %vm336, %v451
        %457 = vst.msk [vmem:[%s454 + $0x10] sm:$0xff] %vm336, %v452
        %458 = vst.msk [vmem:[%s454 + $0x18] sm:$0xff] %vm336, %v453
        %s459 = scalar_lea.vmem %s193, 48 [#allocation2]
        %v460 = vld [vmem:[%s459] sm:$0xff]
        %v461 = vld [vmem:[%s459 + $0x8] sm:$0xff]
        %v462 = vpack.c.bf16 %v461, %v460
        %463 = vmatpush.bf16.msra.mxu0 0
        %464 = vmatpush.bf16.msra.mxu0 0
        %465 = vmatpush.bf16.msra.mxu0 0
        %466 = vmatpush.bf16.msra.mxu0 0
        %467 = vmatpush.bf16.msra.mxu0 0
        %468 = vmatpush.bf16.msra.mxu0 0
        %469 = vmatpush.bf16.msra.mxu0 0
        %470 = vmatpush.bf16.msra.mxu0 %v462
        %471 = vmatmul.bf16.gmra.mxu0 %v275
        %v472 = vpop.f32.mrf.mxu0
        %v473 = vadd.f32 0.0, %v472
        %v474 = vpop.f32.mrf.mxu0
        %v475 = vadd.f32 0.0, %v474
        %476 = vmatmul.bf16.gmra.mxu0 %v278
        %v477 = vpop.f32.mrf.mxu0
        %v478 = vadd.f32 0.0, %v477
        %v479 = vpop.f32.mrf.mxu0
        %v480 = vadd.f32 0.0, %v479
        %481 = vdwg.mxu0
        %v482 = vpack.c.bf16 %v475, %v473
        %v483 = vpack.c.bf16 %v480, %v478
        %v485 = vsel %vm273, %v482, 0
        %v488 = vsel %vm273, %v483, 0
        %490 = vmatpush.bf16.msra.mxu0 0
        %491 = vmatpush.bf16.msra.mxu0 0
        %492 = vmatpush.bf16.msra.mxu0 0
        %493 = vmatpush.bf16.msra.mxu0 0
        %494 = vmatpush.bf16.msra.mxu0 0
        %495 = vmatpush.bf16.msra.mxu0 0
        %496 = vmatpush.bf16.msra.mxu0 0
        %497 = vmatpush.bf16.msra.mxu0 %v305
        %498 = vmatmul.bf16.gmra.mxu0 %v485
        %v499 = vpop.f32.mrf.mxu0
        %v500 = vadd.f32 0.0, %v499
        %v501 = vpop.f32.mrf.mxu0
        %v502 = vadd.f32 0.0, %v501
        %503 = vmatmul.bf16.gmra.mxu0 %v488
        %v504 = vpop.f32.mrf.mxu0
        %v505 = vadd.f32 0.0, %v504
        %v506 = vpop.f32.mrf.mxu0
        %v507 = vadd.f32 0.0, %v506
        %508 = vdwg.mxu0
        %v509 = vsel %vm256, %v500, 0.5
        %v510 = vsel %vm257, %v502, 0.5
        %v511 = vsel %vm258, %v505, 0.5
        %v512 = vsel %vm259, %v507, 0.5
        %s513 = scalar_lea.vmem %s221, 96 [#allocation5]
        %514 = vst.msk [vmem:[%s513] sm:$0xff] %vm336, %v509
        %515 = vst.msk [vmem:[%s513 + $0x8] sm:$0xff] %vm336, %v510
        %516 = vst.msk [vmem:[%s513 + $0x10] sm:$0xff] %vm336, %v511
        %517 = vst.msk [vmem:[%s513 + $0x18] sm:$0xff] %vm336, %v512
        %s518 = sand.u32 %s115, 1
        %s519 = scalar_lea.sflag [#allocation4], %s518
        %s520 = sand.u32 %s115, 1
        %s521 = smul.addr %s520, 128
        %s522 = scalar_lea.vmem [#allocation5], %s521
        // Predicated region
        $region37: #{tpu_custom_call.1} parent=31 // pred_check
          %p523 = pneg %p125
        $region38: #{tpu_custom_call.1} parent=31 // pred_check_branch
          %525 = sbr.rel (%p523) target = $region40
        $region39: #{tpu_custom_call.1} parent=31 // pred_region
          %s526 = smul.u32 4, %s24
          %s527 = smul.u32 4, %s25
          %529 = vsyncadd %s519, 0
          %s530 = smul.addr %s526, 4
          %s531 = sadd.s32 %s527, %s530
          %s532 = smul.addr %s531, 8
          %s533 = scalar_lea.hbm %s3, %s532
          %s534 = sshll.u32 %s522, 4
          %s535 = int_to_ptr.vmem [resolvable:$true] %s534
          %s536 = sshll.u32 %s533, 4
          %s537 = int_to_ptr.hbm [resolvable:$true] %s536
          %542 = dma.vmem_to_hbm [thread:$0]  %s535, 2048, %s537, %s519, 128, 128, 8
        $region40: #{tpu_custom_call.1} parent=31 // pred_fallthru
          _
      $region32: #{tpu_custom_call.1} parent=5 // pred_fallthru
        _
      %p543 = scmp.le.s32.totalorder 2, %s15
      // Predicated region
      $region41: #{tpu_custom_call.1} parent=5 // pred_check
        %p544 = pneg %p543
      $region42: #{tpu_custom_call.1} parent=5 // pred_check_branch
        %546 = sbr.rel (%p544) target = $region44
      $region43: #{tpu_custom_call.1} parent=5 // pred_region
        %s547 = ssub.s32 %s15, 2
        // Predicated region
        $region45: #{tpu_custom_call.1} parent=43 // pred_check
          %p548 = pneg %p131
        $region46: #{tpu_custom_call.1} parent=43 // pred_check_branch
          %550 = sbr.rel (%p548) target = $region48
        $region47: #{tpu_custom_call.1} parent=43 // pred_region
          %s551 = sand.u32 %s116, 1
          %s552 = scalar_lea.sflag [#allocation4], %s551
          %s553 = sand.u32 %s116, 1
          %s554 = smul.addr %s553, 128
          %s555 = scalar_lea.vmem [#allocation5], %s554
          %557 = dma.done %s552, 2048
        $region48: #{tpu_custom_call.1} parent=43 // pred_fallthru
          _
      $region44: #{tpu_custom_call.1} parent=5 // pred_fallthru
        _
    $region6: #{tpu_custom_call.1} parent=1 // loop_footer
      %s19 = sadd.s32 1, %s15
    $region7: #{tpu_custom_call.1} parent=1 // loop_footer_branch
      %14 = sbr.rel target = $region3
    $region8: #{tpu_custom_call.1} parent=1 // loop_exit
      _
    %558 = vsyncpa [#allocation3], 1
    %s559 = scalar_lea.sflag [#allocation3], 1
    %560 = vsyncpa %s559, 1
    %561 = vsyncpa [#allocation4], 1
    %s562 = scalar_lea.sflag [#allocation4], 1
    %563 = vsyncpa %s562, 1

</llo_original>
